<compile_context>
chip_gen: v7x
topology: tpu7x:2x2x1
jax: 0.10.0
libtpu: 0.0.40
codegen_flags: <defaults>
</compile_context>

<pallas_src>
import functools

import numpy as np
import jax
import jax.numpy as jnp
from jax import lax
from jax.experimental import pallas as pl
from jax.experimental.pallas import tpu as pltpu

EPS = 1e-5
NEG_SLOPE = 0.2
CP = 8                  # channels padded to one full sublane tile
KP = 9 * CP + CP        # im2col K: 9 taps * CP + one 8-row slab (ones row -> bias)


def _leaky(v):
    return jnp.where(v >= 0, v, NEG_SLOPE * v)


# ----------------------------------------------------------- Pallas kernel --

def _make_kernel(C, H, W, B_blk):
    HW = H * W
    inv_n = 1.0 / (C * HW)   # GroupNorm element count over REAL channels only

    # flat-index shift per 3x3 tap: reading x[h+dy, w+dx] == x_flat[q + dy*W+dx],
    # implemented as roll(x, (-(dy*W+dx)) % HW) on the lane axis + boundary mask.
    shifts = [(-((t // 3 - 1) * W + (t % 3 - 1))) % HW for t in range(9)]

    def gn(a):
        # One-pass statistics.  Padded channel rows of `a` are exactly zero
        # (zero padded rows in packed W / bias column), so full-tile sums equal
        # sums over the real channels.  s1/s2 are independent reductions.
        s1 = jnp.sum(a, keepdims=True)
        s2 = jnp.sum(a * a, keepdims=True)
        mean = s1 * inv_n
        var = s2 * inv_n - mean * mean
        return (a - mean) * lax.rsqrt(var + EPS)     # EUP rsqrt

    def kernel(x_ref, m_ref, w1_ref, w2_ref, o_ref, p_ref):
        # Constant rows of each sample's im2col slab: local row 9*CP is all
        # ones (multiplies the bias column of W), remaining rows are zero.
        # Scratch is uninitialized and per-core under megacore sharding, so it
        # is (cheaply) written every step rather than gated on program_id.
        ones_row = (lax.broadcasted_iota(jnp.int32, (CP, HW), 0) == 0
                    ).astype(jnp.float32)

        def conv(b, h, w_ref):
            base = b * KP
            # im2col via XLU lane rolls + boundary masks, tile-aligned stores.
            for t in range(9):
                sh = shifts[t]
                if sh == 0:                       # center tap: mask is all ones
                    p_ref[pl.ds(base + t * CP, CP), :] = h
                else:
                    p_ref[pl.ds(base + t * CP, CP), :] = (
                        pltpu.roll(h, sh, axis=1) * m_ref[t])
            # one fused tap/channel/bias contraction: [CP, KP] x [KP, HW]
            return jnp.dot(w_ref[...], p_ref[pl.ds(base, KP), :],
                           preferred_element_type=jnp.float32)

        for b in range(B_blk):                    # static unroll over samples
            p_ref[pl.ds(b * KP + 9 * CP, CP), :] = ones_row
            x = x_ref[b]                          # [CP, HW], padded rows zero
            h = _leaky(gn(conv(b, x, w1_ref)))    # filter1 + ln1 + lrelu1
            y = gn(conv(b, h, w2_ref)) + x        # filter2 + ln2 + residual
            o_ref[b] = _leaky(y).astype(o_ref.dtype)   # lrelu2

    return kernel


# ----------------------------------------------------- packing & wrapper ----

def pack_params(w1_hwio, b1, w2_hwio, b2):
    """Pack HWIO 3x3 weights + bias into [CP, KP] MXU matrices.  Call ONCE and
    reuse across forward calls (hoisted per review)."""
    C = w1_hwio.shape[2]

    def pack(w_hwio, b):
        # Wm[co, t*CP + ci] = w[t//3, t%3, ci, co]; Wm[co, 9*CP] = b[co];
        # every padded row/column is EXACTLY zero (GroupNorm relies on it).
        w9 = jnp.transpose(w_hwio.reshape(9, C, C).astype(jnp.float32),
                           (2, 0, 1))                           # [Cout, 9, Cin]
        w9 = jnp.pad(w9, ((0, CP - C), (0, 0), (0, CP - C)))    # [CP, 9, CP]
        taps = w9.reshape(CP, 9 * CP)
        bias = jnp.pad(b.astype(jnp.float32).reshape(C, 1),
                       ((0, CP - C), (0, KP - 9 * CP - 1)))     # [CP, CP]
        return jnp.concatenate([taps, bias], axis=1)            # [CP, KP]

    return pack(w1_hwio, b1), pack(w2_hwio, b2)


@functools.lru_cache(maxsize=None)
def _tap_masks(H, W):
    # "Same"-padding boundary masks per tap, pre-broadcast to [9, CP, HW]
    # so the in-kernel multiply is a plain vreg-aligned vmul.
    HW = H * W
    rows = np.arange(HW) // W
    cols = np.arange(HW) % W
    masks = np.empty((9, CP, HW), np.float32)
    for t in range(9):
        dy, dx = t // 3 - 1, t % 3 - 1
        m = np.ones(HW, np.float32)
        if dy == -1:
            m *= (rows != 0)
        if dy == 1:
            m *= (rows != H - 1)
        if dx == -1:
            m *= (cols != 0)
        if dx == 1:
            m *= (cols != W - 1)
        masks[t] = np.broadcast_to(m, (CP, HW))
    return jnp.asarray(masks)


def _batching(N):
    # Keep >= 2 grid steps when N >= 2 so both v7x TensorCores get work; fold
    # as many samples per step as possible otherwise to amortize the
    # ~600-cycle per-step overhead (on v5e/v6e extra steps are pure overhead).
    n_steps = 2 if N >= 2 else 1
    b_blk = -(-N // n_steps)     # ceil
    return b_blk, n_steps


@functools.lru_cache(maxsize=None)
def _build_fwd(N, C, H, W):
    HW = H * W
    B_blk, n_steps = _batching(N)
    N_pad = B_blk * n_steps
    masks = _tap_masks(H, W)
    kernel = _make_kernel(C, H, W, B_blk)

    flops = N_pad * (2 * 2 * CP * KP * HW + 40 * CP * HW)   # 2 dots + elementwise
    bytes_accessed = 4 * (2 * N_pad * CP * HW + 9 * CP * HW + 2 * CP * KP)

    call = pl.pallas_call(
        kernel,
        out_shape=jax.ShapeDtypeStruct((N_pad, CP, HW), jnp.float32),
        grid=(n_steps,),
        in_specs=[
            pl.BlockSpec((B_blk, CP, HW), lambda n: (n, 0, 0)),   # x block
            pl.BlockSpec((9, CP, HW), lambda n: (0, 0, 0)),       # tap masks (DMA once)
            pl.BlockSpec((CP, KP), lambda n: (0, 0)),             # W1 (+ bias col)
            pl.BlockSpec((CP, KP), lambda n: (0, 0)),             # W2 (+ bias col)
        ],
        out_specs=pl.BlockSpec((B_blk, CP, HW), lambda n: (n, 0, 0)),
        scratch_shapes=[pltpu.VMEM((B_blk * KP, HW), jnp.float32)],  # im2col slabs
        compiler_params=pltpu.CompilerParams(
            dimension_semantics=("parallel",)),
        cost_estimate=pl.CostEstimate(
            flops=int(flops),
            transcendentals=int(2 * N_pad),
            bytes_accessed=int(bytes_accessed)),
    )

    @jax.jit
    def fwd(x_nchw, w1m, w2m):
        # NCHW -> [N, C, H*W] is a free reshape (H*W already contiguous);
        # pad C -> CP and N -> N_pad with zeros.
        x_flat = x_nchw.reshape(N, C, HW).astype(jnp.float32)
        x_pad = jnp.pad(x_flat, ((0, N_pad - N), (0, CP - C), (0, 0)))
        out = call(x_pad, masks, w1m, w2m)
        return out[:N, :C, :].reshape(N, C, H, W)

    return fwd


def residual_block(x_nchw, w1m, w2m):
    """x_nchw: [N,C,H,W]; w1m/w2m: packed [CP,KP] from pack_params()."""
    N, C, H, W = x_nchw.shape
    return _build_fwd(N, C, H, W)(x_nchw, w1m, w2m)


# --------------------------------------------------------- plain-JAX ref ----

def residual_block_ref(x_nchw, w1_hwio, b1, w2_hwio, b2):
    x = jnp.transpose(x_nchw, (0, 2, 3, 1)).astype(jnp.float32)

    def conv(a, w, b):
        y = jax.lax.conv_general_dilated(
            a, w, window_strides=(1, 1), padding="SAME",
            dimension_numbers=("NHWC", "HWIO", "NHWC"))
        return y + b.reshape(1, 1, 1, -1)

    def gn(a):
        mean = jnp.mean(a, axis=(1, 2, 3), keepdims=True)
        var = jnp.var(a, axis=(1, 2, 3), keepdims=True)
        return (a - mean) / jnp.sqrt(var + EPS)

    def lr(a):
        return jnp.where(a >= 0, a, NEG_SLOPE * a)

    h = lr(gn(conv(x, w1_hwio, b1)))
    h = gn(conv(h, w2_hwio, b2)) + x
    h = lr(h)
    return jnp.transpose(h, (0, 3, 1, 2))


# ------------------------------------------------------------------ main ----

if __name__ == "__main__":
    planes = 4
    N, H, W = 2, 16, 16

    key = jax.random.PRNGKey(0)
    kx, kw1, kb1, kw2, kb2 = jax.random.split(key, 5)

    x = jax.random.normal(kx, (N, planes, H, W), dtype=jnp.float32)         # NCHW
    w1 = jax.random.normal(kw1, (3, 3, planes, planes), dtype=jnp.float32) * 0.2
    b1 = jax.random.normal(kb1, (planes,), dtype=jnp.float32) * 0.1
    w2 = jax.random.normal(kw2, (3, 3, planes, planes), dtype=jnp.float32) * 0.2
    b2 = jax.random.normal(kb2, (planes,), dtype=jnp.float32) * 0.1

    # Pack weights + bias once (reused across calls).
    w1m, w2m = pack_params(w1, b1, w2, b2)

    out = jax.block_until_ready(residual_block(x, w1m, w2m))
    ref = jax.block_until_ready(residual_block_ref(x, w1, b1, w2, b2))

    assert out.shape == (N, planes, H, W)
    assert jnp.allclose(out, ref, atol=1e-3, rtol=1e-3), (
        "mismatch vs reference: max abs diff = %e"
        % float(jnp.max(jnp.abs(out - ref))))

    print("KERNEL_OK")
</pallas_src>

<mosaic_0001>
module attributes {stable_mosaic.version = 11 : i64} {
  func.func @kernel(%arg0: i32, %arg1: memref<1x8x256xf32, #tpu.memory_space<vmem>>, %arg2: memref<9x8x256xf32, #tpu.memory_space<vmem>>, %arg3: memref<8x80xf32, #tpu.memory_space<vmem>>, %arg4: memref<8x80xf32, #tpu.memory_space<vmem>>, %arg5: memref<1x8x256xf32, #tpu.memory_space<vmem>>, %arg6: memref<80x256xf32, #tpu.memory_space<vmem>>) attributes {dimension_semantics = [#tpu.dimension_semantics<parallel>], iteration_bounds = array<i64: 2>, scalar_prefetch = 0 : i64, scratch_operands = 1 : i64, tpu.core_type = #tpu.core_type<tc>, window_params = [{transform_indices = @transform_0, window_bounds = array<i64: 1, 8, 256>}, {pipeline_mode = #tpu.pipeline_mode<synchronous>, transform_indices = @transform_1, window_bounds = array<i64: 9, 8, 256>}, {pipeline_mode = #tpu.pipeline_mode<synchronous>, transform_indices = @transform_2, window_bounds = array<i64: 8, 80>}, {pipeline_mode = #tpu.pipeline_mode<synchronous>, transform_indices = @transform_3, window_bounds = array<i64: 8, 80>}, {transform_indices = @transform_4, window_bounds = array<i64: 1, 8, 256>}]} {
    %0 = tpu.iota {dimensions = array<i32: 0>} : vector<8x256xi32>
    %c0_i32 = arith.constant 0 : i32
    %1 = vector.broadcast %c0_i32 : i32 to vector<8x256xi32>
    %2 = arith.cmpi eq, %0, %1 : vector<8x256xi32>
    %3 = arith.extui %2 : vector<8x256xi1> to vector<8x256xi32>
    %4 = arith.sitofp %3 : vector<8x256xi32> to vector<8x256xf32>
    %c72 = arith.constant 72 : index
    %c0 = arith.constant 0 : index
    %5 = vector.load %arg6[%c72, %c0] : memref<80x256xf32, #tpu.memory_space<vmem>>, vector<8x256xf32>
    tpu.vector_store %arg6[%c72, %c0], %4 {strides = array<i32>} : memref<80x256xf32, #tpu.memory_space<vmem>>, vector<8x256xf32>,
    %c0_0 = arith.constant 0 : index
    %c0_1 = arith.constant 0 : index
    %c0_2 = arith.constant 0 : index
    %6 = vector.load %arg1[%c0_0, %c0_1, %c0_2] : memref<1x8x256xf32, #tpu.memory_space<vmem>>, vector<1x8x256xf32>
    %7 = vector.shape_cast %6 : vector<1x8x256xf32> to vector<8x256xf32>
    %c17_i32 = arith.constant 17 : i32
    %8 = tpu.dynamic_rotate %7 by %c17_i32 dim 1 : vector<8x256xf32>, i32 -> vector<8x256xf32>
    %c0_3 = arith.constant 0 : index
    %c0_4 = arith.constant 0 : index
    %c0_5 = arith.constant 0 : index
    %9 = vector.load %arg2[%c0_3, %c0_4, %c0_5] : memref<9x8x256xf32, #tpu.memory_space<vmem>>, vector<1x8x256xf32>
    %10 = vector.shape_cast %9 : vector<1x8x256xf32> to vector<8x256xf32>
    %11 = arith.mulf %8, %10 : vector<8x256xf32>
    %c0_6 = arith.constant 0 : index
    %c0_7 = arith.constant 0 : index
    %12 = vector.load %arg6[%c0_6, %c0_7] : memref<80x256xf32, #tpu.memory_space<vmem>>, vector<8x256xf32>
    tpu.vector_store %arg6[%c0_6, %c0_7], %11 {strides = array<i32>} : memref<80x256xf32, #tpu.memory_space<vmem>>, vector<8x256xf32>,
    %c16_i32 = arith.constant 16 : i32
    %13 = tpu.dynamic_rotate %7 by %c16_i32 dim 1 : vector<8x256xf32>, i32 -> vector<8x256xf32>
    %c1 = arith.constant 1 : index
    %c0_8 = arith.constant 0 : index
    %c0_9 = arith.constant 0 : index
    %14 = vector.load %arg2[%c1, %c0_8, %c0_9] : memref<9x8x256xf32, #tpu.memory_space<vmem>>, vector<1x8x256xf32>
    %15 = vector.shape_cast %14 : vector<1x8x256xf32> to vector<8x256xf32>
    %16 = arith.mulf %13, %15 : vector<8x256xf32>
    %c8 = arith.constant 8 : index
    %c0_10 = arith.constant 0 : index
    %17 = vector.load %arg6[%c8, %c0_10] : memref<80x256xf32, #tpu.memory_space<vmem>>, vector<8x256xf32>
    tpu.vector_store %arg6[%c8, %c0_10], %16 {strides = array<i32>} : memref<80x256xf32, #tpu.memory_space<vmem>>, vector<8x256xf32>,
    %c15_i32 = arith.constant 15 : i32
    %18 = tpu.dynamic_rotate %7 by %c15_i32 dim 1 : vector<8x256xf32>, i32 -> vector<8x256xf32>
    %c2 = arith.constant 2 : index
    %c0_11 = arith.constant 0 : index
    %c0_12 = arith.constant 0 : index
    %19 = vector.load %arg2[%c2, %c0_11, %c0_12] : memref<9x8x256xf32, #tpu.memory_space<vmem>>, vector<1x8x256xf32>
    %20 = vector.shape_cast %19 : vector<1x8x256xf32> to vector<8x256xf32>
    %21 = arith.mulf %18, %20 : vector<8x256xf32>
    %c16 = arith.constant 16 : index
    %c0_13 = arith.constant 0 : index
    %22 = vector.load %arg6[%c16, %c0_13] : memref<80x256xf32, #tpu.memory_space<vmem>>, vector<8x256xf32>
    tpu.vector_store %arg6[%c16, %c0_13], %21 {strides = array<i32>} : memref<80x256xf32, #tpu.memory_space<vmem>>, vector<8x256xf32>,
    %c1_i32 = arith.constant 1 : i32
    %23 = tpu.dynamic_rotate %7 by %c1_i32 dim 1 : vector<8x256xf32>, i32 -> vector<8x256xf32>
    %c3 = arith.constant 3 : index
    %c0_14 = arith.constant 0 : index
    %c0_15 = arith.constant 0 : index
    %24 = vector.load %arg2[%c3, %c0_14, %c0_15] : memref<9x8x256xf32, #tpu.memory_space<vmem>>, vector<1x8x256xf32>
    %25 = vector.shape_cast %24 : vector<1x8x256xf32> to vector<8x256xf32>
    %26 = arith.mulf %23, %25 : vector<8x256xf32>
    %c24 = arith.constant 24 : index
    %c0_16 = arith.constant 0 : index
    %27 = vector.load %arg6[%c24, %c0_16] : memref<80x256xf32, #tpu.memory_space<vmem>>, vector<8x256xf32>
    tpu.vector_store %arg6[%c24, %c0_16], %26 {strides = array<i32>} : memref<80x256xf32, #tpu.memory_space<vmem>>, vector<8x256xf32>,
    %c32 = arith.constant 32 : index
    %c0_17 = arith.constant 0 : index
    %28 = vector.load %arg6[%c32, %c0_17] : memref<80x256xf32, #tpu.memory_space<vmem>>, vector<8x256xf32>
    tpu.vector_store %arg6[%c32, %c0_17], %7 {strides = array<i32>} : memref<80x256xf32, #tpu.memory_space<vmem>>, vector<8x256xf32>,
    %c255_i32 = arith.constant 255 : i32
    %29 = tpu.dynamic_rotate %7 by %c255_i32 dim 1 : vector<8x256xf32>, i32 -> vector<8x256xf32>
    %c5 = arith.constant 5 : index
    %c0_18 = arith.constant 0 : index
    %c0_19 = arith.constant 0 : index
    %30 = vector.load %arg2[%c5, %c0_18, %c0_19] : memref<9x8x256xf32, #tpu.memory_space<vmem>>, vector<1x8x256xf32>
    %31 = vector.shape_cast %30 : vector<1x8x256xf32> to vector<8x256xf32>
    %32 = arith.mulf %29, %31 : vector<8x256xf32>
    %c40 = arith.constant 40 : index
    %c0_20 = arith.constant 0 : index
    %33 = vector.load %arg6[%c40, %c0_20] : memref<80x256xf32, #tpu.memory_space<vmem>>, vector<8x256xf32>
    tpu.vector_store %arg6[%c40, %c0_20], %32 {strides = array<i32>} : memref<80x256xf32, #tpu.memory_space<vmem>>, vector<8x256xf32>,
    %c241_i32 = arith.constant 241 : i32
    %34 = tpu.dynamic_rotate %7 by %c241_i32 dim 1 : vector<8x256xf32>, i32 -> vector<8x256xf32>
    %c6 = arith.constant 6 : index
    %c0_21 = arith.constant 0 : index
    %c0_22 = arith.constant 0 : index
    %35 = vector.load %arg2[%c6, %c0_21, %c0_22] : memref<9x8x256xf32, #tpu.memory_space<vmem>>, vector<1x8x256xf32>
    %36 = vector.shape_cast %35 : vector<1x8x256xf32> to vector<8x256xf32>
    %37 = arith.mulf %34, %36 : vector<8x256xf32>
    %c48 = arith.constant 48 : index
    %c0_23 = arith.constant 0 : index
    %38 = vector.load %arg6[%c48, %c0_23] : memref<80x256xf32, #tpu.memory_space<vmem>>, vector<8x256xf32>
    tpu.vector_store %arg6[%c48, %c0_23], %37 {strides = array<i32>} : memref<80x256xf32, #tpu.memory_space<vmem>>, vector<8x256xf32>,
    %c240_i32 = arith.constant 240 : i32
    %39 = tpu.dynamic_rotate %7 by %c240_i32 dim 1 : vector<8x256xf32>, i32 -> vector<8x256xf32>
    %c7 = arith.constant 7 : index
    %c0_24 = arith.constant 0 : index
    %c0_25 = arith.constant 0 : index
    %40 = vector.load %arg2[%c7, %c0_24, %c0_25] : memref<9x8x256xf32, #tpu.memory_space<vmem>>, vector<1x8x256xf32>
    %41 = vector.shape_cast %40 : vector<1x8x256xf32> to vector<8x256xf32>
    %42 = arith.mulf %39, %41 : vector<8x256xf32>
    %c56 = arith.constant 56 : index
    %c0_26 = arith.constant 0 : index
    %43 = vector.load %arg6[%c56, %c0_26] : memref<80x256xf32, #tpu.memory_space<vmem>>, vector<8x256xf32>
    tpu.vector_store %arg6[%c56, %c0_26], %42 {strides = array<i32>} : memref<80x256xf32, #tpu.memory_space<vmem>>, vector<8x256xf32>,
    %c239_i32 = arith.constant 239 : i32
    %44 = tpu.dynamic_rotate %7 by %c239_i32 dim 1 : vector<8x256xf32>, i32 -> vector<8x256xf32>
    %c8_27 = arith.constant 8 : index
    %c0_28 = arith.constant 0 : index
    %c0_29 = arith.constant 0 : index
    %45 = vector.load %arg2[%c8_27, %c0_28, %c0_29] : memref<9x8x256xf32, #tpu.memory_space<vmem>>, vector<1x8x256xf32>
    %46 = vector.shape_cast %45 : vector<1x8x256xf32> to vector<8x256xf32>
    %47 = arith.mulf %44, %46 : vector<8x256xf32>
    %c64 = arith.constant 64 : index
    %c0_30 = arith.constant 0 : index
    %48 = vector.load %arg6[%c64, %c0_30] : memref<80x256xf32, #tpu.memory_space<vmem>>, vector<8x256xf32>
    tpu.vector_store %arg6[%c64, %c0_30], %47 {strides = array<i32>} : memref<80x256xf32, #tpu.memory_space<vmem>>, vector<8x256xf32>,
    %c0_31 = arith.constant 0 : index
    %c0_32 = arith.constant 0 : index
    %49 = vector.load %arg3[%c0_31, %c0_32] : memref<8x80xf32, #tpu.memory_space<vmem>>, vector<8x80xf32>
    %c0_33 = arith.constant 0 : index
    %c0_34 = arith.constant 0 : index
    %50 = vector.load %arg6[%c0_33, %c0_34] : memref<80x256xf32, #tpu.memory_space<vmem>>, vector<80x256xf32>
    %cst = arith.constant dense<0.000000e+00> : vector<8x256xf32>
    %51 = tpu.matmul %49, %50, %cst {dimension_numbers = #tpu.dot_dimension_numbers<[1], [0], [0], [1], [0, 0, 1, 1], [], []>} : vector<8x80xf32>, vector<80x256xf32>, vector<8x256xf32> -> vector<8x256xf32>
    %52 = vector.shape_cast %51 : vector<8x256xf32> to vector<1x8x256xf32>
    %cst_35 = arith.constant dense<0.000000e+00> : vector<1xf32>
    %53 = vector.multi_reduction <add>, %52, %cst_35 [1, 2] : vector<1x8x256xf32> to vector<1xf32>
    %54 = vector.shape_cast %53 : vector<1xf32> to vector<1x1x1xf32>
    %55 = vector.extract %54[0, 0, 0] : f32 from vector<1x1x1xf32>
    %56 = vector.broadcast %55 : f32 to vector<1x1xf32>
    %57 = arith.mulf %51, %51 : vector<8x256xf32>
    %58 = vector.shape_cast %57 : vector<8x256xf32> to vector<1x8x256xf32>
    %cst_36 = arith.constant dense<0.000000e+00> : vector<1xf32>
    %59 = vector.multi_reduction <add>, %58, %cst_36 [1, 2] : vector<1x8x256xf32> to vector<1xf32>
    %60 = vector.shape_cast %59 : vector<1xf32> to vector<1x1x1xf32>
    %61 = vector.extract %60[0, 0, 0] : f32 from vector<1x1x1xf32>
    %62 = vector.broadcast %61 : f32 to vector<1x1xf32>
    %cst_37 = arith.constant 9.765625E-4 : f32
    %63 = vector.broadcast %cst_37 : f32 to vector<1x1xf32>
    %64 = arith.mulf %56, %63 : vector<1x1xf32>
    %cst_38 = arith.constant 9.765625E-4 : f32
    %65 = vector.broadcast %cst_38 : f32 to vector<1x1xf32>
    %66 = arith.mulf %62, %65 : vector<1x1xf32>
    %67 = arith.mulf %64, %64 : vector<1x1xf32>
    %68 = arith.subf %66, %67 : vector<1x1xf32>
    %69 = vector.broadcast %64 : vector<1x1xf32> to vector<8x256xf32>
    %70 = arith.subf %51, %69 : vector<8x256xf32>
    %cst_39 = arith.constant 9.99999974E-6 : f32
    %71 = vector.broadcast %cst_39 : f32 to vector<1x1xf32>
    %72 = arith.addf %68, %71 : vector<1x1xf32>
    %73 = math.rsqrt %72 : vector<1x1xf32>
    %74 = vector.broadcast %73 : vector<1x1xf32> to vector<8x256xf32>
    %75 = arith.mulf %70, %74 : vector<8x256xf32>
    %cst_40 = arith.constant 0.000000e+00 : f32
    %76 = vector.broadcast %cst_40 : f32 to vector<8x256xf32>
    %77 = arith.cmpf oge, %75, %76 : vector<8x256xf32>
    %cst_41 = arith.constant 2.000000e-01 : f32
    %78 = vector.broadcast %cst_41 : f32 to vector<8x256xf32>
    %79 = arith.mulf %78, %75 : vector<8x256xf32>
    %80 = arith.select %77, %75, %79 : vector<8x256xi1>, vector<8x256xf32>
    %c17_i32_42 = arith.constant 17 : i32
    %81 = tpu.dynamic_rotate %80 by %c17_i32_42 dim 1 : vector<8x256xf32>, i32 -> vector<8x256xf32>
    %c0_43 = arith.constant 0 : index
    %c0_44 = arith.constant 0 : index
    %c0_45 = arith.constant 0 : index
    %82 = vector.load %arg2[%c0_43, %c0_44, %c0_45] : memref<9x8x256xf32, #tpu.memory_space<vmem>>, vector<1x8x256xf32>
    %83 = vector.shape_cast %82 : vector<1x8x256xf32> to vector<8x256xf32>
    %84 = arith.mulf %81, %83 : vector<8x256xf32>
    %c0_46 = arith.constant 0 : index
    %c0_47 = arith.constant 0 : index
    %85 = vector.load %arg6[%c0_46, %c0_47] : memref<80x256xf32, #tpu.memory_space<vmem>>, vector<8x256xf32>
    tpu.vector_store %arg6[%c0_46, %c0_47], %84 {strides = array<i32>} : memref<80x256xf32, #tpu.memory_space<vmem>>, vector<8x256xf32>,
    %c16_i32_48 = arith.constant 16 : i32
    %86 = tpu.dynamic_rotate %80 by %c16_i32_48 dim 1 : vector<8x256xf32>, i32 -> vector<8x256xf32>
    %c1_49 = arith.constant 1 : index
    %c0_50 = arith.constant 0 : index
    %c0_51 = arith.constant 0 : index
    %87 = vector.load %arg2[%c1_49, %c0_50, %c0_51] : memref<9x8x256xf32, #tpu.memory_space<vmem>>, vector<1x8x256xf32>
    %88 = vector.shape_cast %87 : vector<1x8x256xf32> to vector<8x256xf32>
    %89 = arith.mulf %86, %88 : vector<8x256xf32>
    %c8_52 = arith.constant 8 : index
    %c0_53 = arith.constant 0 : index
    %90 = vector.load %arg6[%c8_52, %c0_53] : memref<80x256xf32, #tpu.memory_space<vmem>>, vector<8x256xf32>
    tpu.vector_store %arg6[%c8_52, %c0_53], %89 {strides = array<i32>} : memref<80x256xf32, #tpu.memory_space<vmem>>, vector<8x256xf32>,
    %c15_i32_54 = arith.constant 15 : i32
    %91 = tpu.dynamic_rotate %80 by %c15_i32_54 dim 1 : vector<8x256xf32>, i32 -> vector<8x256xf32>
    %c2_55 = arith.constant 2 : index
    %c0_56 = arith.constant 0 : index
    %c0_57 = arith.constant 0 : index
    %92 = vector.load %arg2[%c2_55, %c0_56, %c0_57] : memref<9x8x256xf32, #tpu.memory_space<vmem>>, vector<1x8x256xf32>
    %93 = vector.shape_cast %92 : vector<1x8x256xf32> to vector<8x256xf32>
    %94 = arith.mulf %91, %93 : vector<8x256xf32>
    %c16_58 = arith.constant 16 : index
    %c0_59 = arith.constant 0 : index
    %95 = vector.load %arg6[%c16_58, %c0_59] : memref<80x256xf32, #tpu.memory_space<vmem>>, vector<8x256xf32>
    tpu.vector_store %arg6[%c16_58, %c0_59], %94 {strides = array<i32>} : memref<80x256xf32, #tpu.memory_space<vmem>>, vector<8x256xf32>,
    %c1_i32_60 = arith.constant 1 : i32
    %96 = tpu.dynamic_rotate %80 by %c1_i32_60 dim 1 : vector<8x256xf32>, i32 -> vector<8x256xf32>
    %c3_61 = arith.constant 3 : index
    %c0_62 = arith.constant 0 : index
    %c0_63 = arith.constant 0 : index
    %97 = vector.load %arg2[%c3_61, %c0_62, %c0_63] : memref<9x8x256xf32, #tpu.memory_space<vmem>>, vector<1x8x256xf32>
    %98 = vector.shape_cast %97 : vector<1x8x256xf32> to vector<8x256xf32>
    %99 = arith.mulf %96, %98 : vector<8x256xf32>
    %c24_64 = arith.constant 24 : index
    %c0_65 = arith.constant 0 : index
    %100 = vector.load %arg6[%c24_64, %c0_65] : memref<80x256xf32, #tpu.memory_space<vmem>>, vector<8x256xf32>
    tpu.vector_store %arg6[%c24_64, %c0_65], %99 {strides = array<i32>} : memref<80x256xf32, #tpu.memory_space<vmem>>, vector<8x256xf32>,
    %c32_66 = arith.constant 32 : index
    %c0_67 = arith.constant 0 : index
    %101 = vector.load %arg6[%c32_66, %c0_67] : memref<80x256xf32, #tpu.memory_space<vmem>>, vector<8x256xf32>
    tpu.vector_store %arg6[%c32_66, %c0_67], %80 {strides = array<i32>} : memref<80x256xf32, #tpu.memory_space<vmem>>, vector<8x256xf32>,
    %c255_i32_68 = arith.constant 255 : i32
    %102 = tpu.dynamic_rotate %80 by %c255_i32_68 dim 1 : vector<8x256xf32>, i32 -> vector<8x256xf32>
    %c5_69 = arith.constant 5 : index
    %c0_70 = arith.constant 0 : index
    %c0_71 = arith.constant 0 : index
    %103 = vector.load %arg2[%c5_69, %c0_70, %c0_71] : memref<9x8x256xf32, #tpu.memory_space<vmem>>, vector<1x8x256xf32>
    %104 = vector.shape_cast %103 : vector<1x8x256xf32> to vector<8x256xf32>
    %105 = arith.mulf %102, %104 : vector<8x256xf32>
    %c40_72 = arith.constant 40 : index
    %c0_73 = arith.constant 0 : index
    %106 = vector.load %arg6[%c40_72, %c0_73] : memref<80x256xf32, #tpu.memory_space<vmem>>, vector<8x256xf32>
    tpu.vector_store %arg6[%c40_72, %c0_73], %105 {strides = array<i32>} : memref<80x256xf32, #tpu.memory_space<vmem>>, vector<8x256xf32>,
    %c241_i32_74 = arith.constant 241 : i32
    %107 = tpu.dynamic_rotate %80 by %c241_i32_74 dim 1 : vector<8x256xf32>, i32 -> vector<8x256xf32>
    %c6_75 = arith.constant 6 : index
    %c0_76 = arith.constant 0 : index
    %c0_77 = arith.constant 0 : index
    %108 = vector.load %arg2[%c6_75, %c0_76, %c0_77] : memref<9x8x256xf32, #tpu.memory_space<vmem>>, vector<1x8x256xf32>
    %109 = vector.shape_cast %108 : vector<1x8x256xf32> to vector<8x256xf32>
    %110 = arith.mulf %107, %109 : vector<8x256xf32>
    %c48_78 = arith.constant 48 : index
    %c0_79 = arith.constant 0 : index
    %111 = vector.load %arg6[%c48_78, %c0_79] : memref<80x256xf32, #tpu.memory_space<vmem>>, vector<8x256xf32>
    tpu.vector_store %arg6[%c48_78, %c0_79], %110 {strides = array<i32>} : memref<80x256xf32, #tpu.memory_space<vmem>>, vector<8x256xf32>,
    %c240_i32_80 = arith.constant 240 : i32
    %112 = tpu.dynamic_rotate %80 by %c240_i32_80 dim 1 : vector<8x256xf32>, i32 -> vector<8x256xf32>
    %c7_81 = arith.constant 7 : index
    %c0_82 = arith.constant 0 : index
    %c0_83 = arith.constant 0 : index
    %113 = vector.load %arg2[%c7_81, %c0_82, %c0_83] : memref<9x8x256xf32, #tpu.memory_space<vmem>>, vector<1x8x256xf32>
    %114 = vector.shape_cast %113 : vector<1x8x256xf32> to vector<8x256xf32>
    %115 = arith.mulf %112, %114 : vector<8x256xf32>
    %c56_84 = arith.constant 56 : index
    %c0_85 = arith.constant 0 : index
    %116 = vector.load %arg6[%c56_84, %c0_85] : memref<80x256xf32, #tpu.memory_space<vmem>>, vector<8x256xf32>
    tpu.vector_store %arg6[%c56_84, %c0_85], %115 {strides = array<i32>} : memref<80x256xf32, #tpu.memory_space<vmem>>, vector<8x256xf32>,
    %c239_i32_86 = arith.constant 239 : i32
    %117 = tpu.dynamic_rotate %80 by %c239_i32_86 dim 1 : vector<8x256xf32>, i32 -> vector<8x256xf32>
    %c8_87 = arith.constant 8 : index
    %c0_88 = arith.constant 0 : index
    %c0_89 = arith.constant 0 : index
    %118 = vector.load %arg2[%c8_87, %c0_88, %c0_89] : memref<9x8x256xf32, #tpu.memory_space<vmem>>, vector<1x8x256xf32>
    %119 = vector.shape_cast %118 : vector<1x8x256xf32> to vector<8x256xf32>
    %120 = arith.mulf %117, %119 : vector<8x256xf32>
    %c64_90 = arith.constant 64 : index
    %c0_91 = arith.constant 0 : index
    %121 = vector.load %arg6[%c64_90, %c0_91] : memref<80x256xf32, #tpu.memory_space<vmem>>, vector<8x256xf32>
    tpu.vector_store %arg6[%c64_90, %c0_91], %120 {strides = array<i32>} : memref<80x256xf32, #tpu.memory_space<vmem>>, vector<8x256xf32>,
    %c0_92 = arith.constant 0 : index
    %c0_93 = arith.constant 0 : index
    %122 = vector.load %arg4[%c0_92, %c0_93] : memref<8x80xf32, #tpu.memory_space<vmem>>, vector<8x80xf32>
    %c0_94 = arith.constant 0 : index
    %c0_95 = arith.constant 0 : index
    %123 = vector.load %arg6[%c0_94, %c0_95] : memref<80x256xf32, #tpu.memory_space<vmem>>, vector<80x256xf32>
    %cst_96 = arith.constant dense<0.000000e+00> : vector<8x256xf32>
    %124 = tpu.matmul %122, %123, %cst_96 {dimension_numbers = #tpu.dot_dimension_numbers<[1], [0], [0], [1], [0, 0, 1, 1], [], []>} : vector<8x80xf32>, vector<80x256xf32>, vector<8x256xf32> -> vector<8x256xf32>
    %125 = vector.shape_cast %124 : vector<8x256xf32> to vector<1x8x256xf32>
    %cst_97 = arith.constant dense<0.000000e+00> : vector<1xf32>
    %126 = vector.multi_reduction <add>, %125, %cst_97 [1, 2] : vector<1x8x256xf32> to vector<1xf32>
    %127 = vector.shape_cast %126 : vector<1xf32> to vector<1x1x1xf32>
    %128 = vector.extract %127[0, 0, 0] : f32 from vector<1x1x1xf32>
    %129 = vector.broadcast %128 : f32 to vector<1x1xf32>
    %130 = arith.mulf %124, %124 : vector<8x256xf32>
    %131 = vector.shape_cast %130 : vector<8x256xf32> to vector<1x8x256xf32>
    %cst_98 = arith.constant dense<0.000000e+00> : vector<1xf32>
    %132 = vector.multi_reduction <add>, %131, %cst_98 [1, 2] : vector<1x8x256xf32> to vector<1xf32>
    %133 = vector.shape_cast %132 : vector<1xf32> to vector<1x1x1xf32>
    %134 = vector.extract %133[0, 0, 0] : f32 from vector<1x1x1xf32>
    %135 = vector.broadcast %134 : f32 to vector<1x1xf32>
    %cst_99 = arith.constant 9.765625E-4 : f32
    %136 = vector.broadcast %cst_99 : f32 to vector<1x1xf32>
    %137 = arith.mulf %129, %136 : vector<1x1xf32>
    %cst_100 = arith.constant 9.765625E-4 : f32
    %138 = vector.broadcast %cst_100 : f32 to vector<1x1xf32>
    %139 = arith.mulf %135, %138 : vector<1x1xf32>
    %140 = arith.mulf %137, %137 : vector<1x1xf32>
    %141 = arith.subf %139, %140 : vector<1x1xf32>
    %142 = vector.broadcast %137 : vector<1x1xf32> to vector<8x256xf32>
    %143 = arith.subf %124, %142 : vector<8x256xf32>
    %cst_101 = arith.constant 9.99999974E-6 : f32
    %144 = vector.broadcast %cst_101 : f32 to vector<1x1xf32>
    %145 = arith.addf %141, %144 : vector<1x1xf32>
    %146 = math.rsqrt %145 : vector<1x1xf32>
    %147 = vector.broadcast %146 : vector<1x1xf32> to vector<8x256xf32>
    %148 = arith.mulf %143, %147 : vector<8x256xf32>
    %149 = arith.addf %148, %7 : vector<8x256xf32>
    %cst_102 = arith.constant 0.000000e+00 : f32
    %150 = vector.broadcast %cst_102 : f32 to vector<8x256xf32>
    %151 = arith.cmpf oge, %149, %150 : vector<8x256xf32>
    %cst_103 = arith.constant 2.000000e-01 : f32
    %152 = vector.broadcast %cst_103 : f32 to vector<8x256xf32>
    %153 = arith.mulf %152, %149 : vector<8x256xf32>
    %154 = arith.select %151, %149, %153 : vector<8x256xi1>, vector<8x256xf32>
    %c0_104 = arith.constant 0 : index
    %c0_105 = arith.constant 0 : index
    %c0_106 = arith.constant 0 : index
    %155 = vector.load %arg5[%c0_104, %c0_105, %c0_106] : memref<1x8x256xf32, #tpu.memory_space<vmem>>, vector<1x8x256xf32>
    %156 = vector.shape_cast %155 : vector<1x8x256xf32> to vector<8x256xf32>
    %157 = vector.shape_cast %154 : vector<8x256xf32> to vector<1x8x256xf32>
    tpu.vector_store %arg5[%c0_104, %c0_105, %c0_106], %157 {strides = array<i32>} : memref<1x8x256xf32, #tpu.memory_space<vmem>>, vector<1x8x256xf32>,
    return
  }
  func.func @transform_0(%arg0: i32) -> (i32, i32, i32) {
    %c0_i32 = arith.constant 0 : i32
    %c0_i32_0 = arith.constant 0 : i32
    %c0_i32_1 = arith.constant 0 : i32
    return %arg0, %c0_i32, %c0_i32_0 : i32, i32, i32
  }
  func.func @transform_1(%arg0: i32) -> (i32, i32, i32) {
    %c0_i32 = arith.constant 0 : i32
    %c0_i32_0 = arith.constant 0 : i32
    %c0_i32_1 = arith.constant 0 : i32
    %c0_i32_2 = arith.constant 0 : i32
    return %c0_i32, %c0_i32_0, %c0_i32_1 : i32, i32, i32
  }
  func.func @transform_2(%arg0: i32) -> (i32, i32) {
    %c0_i32 = arith.constant 0 : i32
    %c0_i32_0 = arith.constant 0 : i32
    %c0_i32_1 = arith.constant 0 : i32
    return %c0_i32, %c0_i32_0 : i32, i32
  }
  func.func @transform_3(%arg0: i32) -> (i32, i32) {
    %c0_i32 = arith.constant 0 : i32
    %c0_i32_0 = arith.constant 0 : i32
    %c0_i32_1 = arith.constant 0 : i32
    return %c0_i32, %c0_i32_0 : i32, i32
  }
  func.func @transform_4(%arg0: i32) -> (i32, i32, i32) {
    %c0_i32 = arith.constant 0 : i32
    %c0_i32_0 = arith.constant 0 : i32
    %c0_i32_1 = arith.constant 0 : i32
    return %arg0, %c0_i32, %c0_i32_0 : i32, i32, i32
  }
}

</mosaic_0001>

<llo_original>
// kernel: fwd.1
$region0: #{fwd.1}
  #allocation0 [shape = 'u32[]', space=smem, size = 0x4, offset = 0x4, fixed_abs, tag = 'smem constant byte address 0x4 - core index']
  #allocation1 [shape = 'u32[144,128]{1,0:T(1,128)}', space=vmem, size = 0x12000, scoped, tag = 'internal scratch']
  #allocation2 [shape = 'f32[80,256]{1,0:T(8,128)}', space=vmem, size = 0x14000, scoped, tag = 'scratch operand']
  %s0 = inlined_call_operand.vmem [shape: f32[2,8,256], index: 0, kind: input, shape index: {}]
  %s1 = inlined_call_operand.vmem [shape: f32[9,8,256], index: 1, kind: input, shape index: {}]
  %s2 = inlined_call_operand.vmem [shape: f32[8,80], index: 2, kind: input, shape index: {}]
  %s3 = inlined_call_operand.vmem [shape: f32[8,80], index: 3, kind: input, shape index: {}]
  %s4 = inlined_call_operand.vmem [shape: f32[2,8,256], index: 4, kind: output, shape index: {}]
  %s5 = sld [smem:[#allocation0]]
  $region49: #{fwd.1} parent=0
    _
  %s7 = ssub.s32 1, %s5
  %s8 = scalar_select 0, %s7, %s5
  loop: start=0, step=1, limit=4
  $region2: #{fwd.1} parent=0 // loop_pre_header
    _
  $region3: #{fwd.1} parent=0 // loop_header
    %s10 = sphi 0, %s14
    %p11 = scmp.ge.s32.totalorder %s10, 4
    %s20 = sphi 0, %s22
    %s23 = sphi 0, %s20
    %s24 = sphi 0, %s23
    %s40 = sphi 0, %s24
    %s44 = sphi 0, %s44
    %s46 = sphi 0, %s44
    %s47 = sphi 0, %s46
    %s61 = sphi 0, %s47
    %s65 = sphi 0, %s65
    %s67 = sphi 0, %s65
    %s68 = sphi 0, %s67
    %s82 = sphi 0, %s68
    %s86 = sphi 0, %s86
    %s88 = sphi 0, %s86
    %s89 = sphi 0, %s88
    %s103 = sphi 0, %s89
    %s109 = sphi 0, %s111
    %s112 = sphi 0, %s109
    %s113 = sphi 0, %s112
    %s129 = sphi 0, %s113
  $region4: #{fwd.1} parent=0 // loop_header_branch
    %13 = sbr.rel (%p11) target = $region8
  $region5: #{fwd.1} parent=0 // loop_body
    %s15 = ssub.s32 %s10, 1
    %s16 = ssub.s32 %s10, 2
    %s17 = sadd.s32 %s10, 1
    %s18 = ssub.s32 %s10, %s17
    %p19 = scmp.eq.s32.totalorder %s18, 0
    %s21 = sadd.s32 %s20, 1
    %s22 = scalar_select %p19, %s20, %s21
    %p25 = pneg %p19
    %p26 = scmp.eq.s32.totalorder %s10, 1
    %p27 = por %p25, %p26
    %p28 = scmp.ne.s32.totalorder %s20, %s23
    %p29 = scmp.eq.s32.totalorder %s10, 0
    %p30 = por %p28, %p29
    %p31 = scmp.ne.s32.totalorder %s20, %s23
    %p32 = scmp.eq.s32.totalorder %s15, 1
    %p33 = por %p31, %p32
    %p34 = scmp.ne.s32.totalorder %s23, %s24
    %p35 = scmp.eq.s32.totalorder %s15, 0
    %p36 = por %p34, %p35
    %p37 = scmp.ne.s32.totalorder %s23, %s24
    %p38 = scmp.eq.s32.totalorder %s16, 1
    %p39 = por %p37, %p38
    %p41 = scmp.ne.s32.totalorder %s24, %s40
    %p42 = scmp.eq.s32.totalorder %s16, 0
    %p43 = por %p41, %p42
    %s45 = sadd.s32 %s44, 1
    %p48 = scmp.eq.s32.totalorder %s10, 1
    %p49 = scmp.ne.s32.totalorder %s44, %s46
    %p50 = scmp.eq.s32.totalorder %s10, 0
    %p51 = por %p49, %p50
    %p52 = scmp.ne.s32.totalorder %s44, %s46
    %p53 = scmp.eq.s32.totalorder %s15, 1
    %p54 = por %p52, %p53
    %p55 = scmp.ne.s32.totalorder %s46, %s47
    %p56 = scmp.eq.s32.totalorder %s15, 0
    %p57 = por %p55, %p56
    %p58 = scmp.ne.s32.totalorder %s46, %s47
    %p59 = scmp.eq.s32.totalorder %s16, 1
    %p60 = por %p58, %p59
    %p62 = scmp.ne.s32.totalorder %s47, %s61
    %p63 = scmp.eq.s32.totalorder %s16, 0
    %p64 = por %p62, %p63
    %s66 = sadd.s32 %s65, 1
    %p69 = scmp.eq.s32.totalorder %s10, 1
    %p70 = scmp.ne.s32.totalorder %s65, %s67
    %p71 = scmp.eq.s32.totalorder %s10, 0
    %p72 = por %p70, %p71
    %p73 = scmp.ne.s32.totalorder %s65, %s67
    %p74 = scmp.eq.s32.totalorder %s15, 1
    %p75 = por %p73, %p74
    %p76 = scmp.ne.s32.totalorder %s67, %s68
    %p77 = scmp.eq.s32.totalorder %s15, 0
    %p78 = por %p76, %p77
    %p79 = scmp.ne.s32.totalorder %s67, %s68
    %p80 = scmp.eq.s32.totalorder %s16, 1
    %p81 = por %p79, %p80
    %p83 = scmp.ne.s32.totalorder %s68, %s82
    %p84 = scmp.eq.s32.totalorder %s16, 0
    %p85 = por %p83, %p84
    %s87 = sadd.s32 %s86, 1
    %p90 = scmp.eq.s32.totalorder %s10, 1
    %p91 = scmp.ne.s32.totalorder %s86, %s88
    %p92 = scmp.eq.s32.totalorder %s10, 0
    %p93 = por %p91, %p92
    %p94 = scmp.ne.s32.totalorder %s86, %s88
    %p95 = scmp.eq.s32.totalorder %s15, 1
    %p96 = por %p94, %p95
    %p97 = scmp.ne.s32.totalorder %s88, %s89
    %p98 = scmp.eq.s32.totalorder %s15, 0
    %p99 = por %p97, %p98
    %p100 = scmp.ne.s32.totalorder %s88, %s89
    %p101 = scmp.eq.s32.totalorder %s16, 1
    %p102 = por %p100, %p101
    %p104 = scmp.ne.s32.totalorder %s89, %s103
    %p105 = scmp.eq.s32.totalorder %s16, 0
    %p106 = por %p104, %p105
    %s107 = ssub.s32 %s10, %s17
    %p108 = scmp.eq.s32.totalorder %s107, 0
    %s110 = sadd.s32 %s109, 1
    %s111 = scalar_select %p108, %s109, %s110
    %p114 = pneg %p108
    %p115 = scmp.eq.s32.totalorder %s10, 1
    %p116 = por %p114, %p115
    %p117 = scmp.ne.s32.totalorder %s109, %s112
    %p118 = scmp.eq.s32.totalorder %s10, 0
    %p119 = por %p117, %p118
    %p120 = scmp.ne.s32.totalorder %s109, %s112
    %p121 = scmp.eq.s32.totalorder %s15, 1
    %p122 = por %p120, %p121
    %p123 = scmp.ne.s32.totalorder %s112, %s113
    %p124 = scmp.eq.s32.totalorder %s15, 0
    %p125 = por %p123, %p124
    %p126 = scmp.ne.s32.totalorder %s112, %s113
    %p127 = scmp.eq.s32.totalorder %s16, 1
    %p128 = por %p126, %p127
    %p130 = scmp.ne.s32.totalorder %s113, %s129
    %p131 = scmp.eq.s32.totalorder %s16, 0
    %p132 = por %p130, %p131
    %p133 = scmp.le.s32.totalorder 1, %s10
    %p134 = scmp.lt.s32.totalorder %s10, 3
    %p135 = pnand %p133, %p134
    %p136 = pneg %p135
    // Predicated region
    $region9: #{fwd.1} parent=5 // pred_check
      _
    $region10: #{fwd.1} parent=5 // pred_check_branch
      %138 = sbr.rel (%p135) target = $region12
    $region11: #{fwd.1} parent=5 // pred_region
      %s139 = ssub.s32 %s10, 1
      // Predicated region
      $region13: #{fwd.1} parent=11 // pred_check
        %p140 = pneg %p57
      $region14: #{fwd.1} parent=11 // pred_check_branch
        %142 = sbr.rel (%p140) target = $region16
      $region15: #{fwd.1} parent=11 // pred_region
        _
      $region16: #{fwd.1} parent=11 // pred_fallthru
        _
      // Predicated region
      $region17: #{fwd.1} parent=11 // pred_check
        %p143 = pneg %p78
      $region18: #{fwd.1} parent=11 // pred_check_branch
        %145 = sbr.rel (%p143) target = $region20
      $region19: #{fwd.1} parent=11 // pred_region
        _
      $region20: #{fwd.1} parent=11 // pred_fallthru
        _
      // Predicated region
      $region21: #{fwd.1} parent=11 // pred_check
        %p146 = pneg %p99
      $region22: #{fwd.1} parent=11 // pred_check_branch
        %148 = sbr.rel (%p146) target = $region24
      $region23: #{fwd.1} parent=11 // pred_region
        _
      $region24: #{fwd.1} parent=11 // pred_fallthru
        _
    $region12: #{fwd.1} parent=5 // pred_fallthru
      _
    %p149 = scmp.lt.s32.totalorder %s10, 2
    // Predicated region
    $region25: #{fwd.1} parent=5 // pred_check
      %p150 = pneg %p149
    $region26: #{fwd.1} parent=5 // pred_check_branch
      %152 = sbr.rel (%p150) target = $region28
    $region27: #{fwd.1} parent=5 // pred_region
      // Predicated region
      $region29: #{fwd.1} parent=27 // pred_check
        %p153 = pneg %p30
      $region30: #{fwd.1} parent=27 // pred_check_branch
        %155 = sbr.rel (%p153) target = $region32
      $region31: #{fwd.1} parent=27 // pred_region
        %p156 = scmp.lt.s32.totalorder %s10, 1
        %s157 = scalar_select %p156, %s10, 1
        %s158 = smul.addr %s157, 2
        %s159 = smul.addr %s158, 8
        %s160 = scalar_lea.vmem %s0, %s159
      $region32: #{fwd.1} parent=27 // pred_fallthru
        _
    $region28: #{fwd.1} parent=5 // pred_fallthru
      _
    %p161 = scmp.le.s32.totalorder 1, %s10
    %p162 = scmp.lt.s32.totalorder %s10, 3
    %p163 = pnand %p161, %p162
    %p164 = pneg %p163
    // Predicated region
    $region33: #{fwd.1} parent=5 // pred_check
      _
    $region34: #{fwd.1} parent=5 // pred_check_branch
      %166 = sbr.rel (%p163) target = $region36
    $region35: #{fwd.1} parent=5 // pred_region
      %s167 = ssub.s32 %s10, 1
      %p168 = scmp.lt.s32.totalorder %s15, 1
      %s169 = scalar_select %p168, %s15, 1
      %s170 = smul.addr %s169, 2
      %s171 = smul.addr %s170, 8
      %s172 = scalar_lea.vmem %s0, %s171
      %p173 = pneg %p36
      %p174 = pneg %p33
      %p175 = pneg %p57
      %p176 = pneg %p54
      %p177 = pneg %p78
      %p178 = pneg %p75
      %p179 = pneg %p99
      %p180 = pneg %p96
      %p181 = pneg %p125
      %p182 = pneg %p122
      %p183 = scmp.lt.s32.totalorder %s15, 1
      %s184 = scalar_select %p183, %s15, 1
      %s185 = smul.addr %s184, 2
      %s186 = smul.addr %s185, 8
      %s187 = scalar_lea.vmem %s4, %s186
      %p188 = scmp.lt.s32.totalorder %s15, 1
      %s189 = scalar_select %p188, %s15, 1
      %s190 = smul.addr %s189, 2
      %s191 = smul.addr %s190, 8
      %s192 = scalar_lea.vmem %s0, %s191
      %p193 = scmp.lt.s32.totalorder %s15, 1
      %s194 = scalar_select %p193, %s15, 1
      %s195 = smul.addr %s194, 2
      %s196 = smul.addr %s195, 8
      %s197 = scalar_lea.vmem %s4, %s196
      %v198 = vlaneseq
      %v199 = vshrl.u32 %v198, 7
      %vm200 = vcmp.eq.s32.totalorder %v199, 0
      %v201 = vsel %vm200, 1, 0
      %v202 = vcvt.s32.f32 %v201
      %203 = vst [vmem:[#allocation2 + $0x90] sm:$0xff] %v202
      %204 = vst [vmem:[#allocation2 + $0x98] sm:$0xff] %v202
      %v205 = vld [vmem:[%s192] sm:$0xff]
      %v206 = vld [vmem:[%s192 + $0x8] sm:$0xff]
      %207 = vrot.lane.b32.xlu0 %v205, 17
      %v208 = vpop.permute.xlu0 %207
      %209 = vrot.lane.b32.xlu0 %v206, 17
      %v210 = vpop.permute.xlu0 %209
      %v211 = vlaneseq
      %v212 = vand.u32 %v211, 127
      %vm213 = vcmp.lt.s32.totalorder %v212, 17
      %v214 = vsel %vm213, %v208, %v210
      %v215 = vsel %vm213, %v210, %v208
      %v216 = vld [vmem:[%s1] sm:$0xff]
      %v217 = vld [vmem:[%s1 + $0x8] sm:$0xff]
      %v218 = vmul.f32 %v215, %v216
      %v219 = vmul.f32 %v214, %v217
      %220 = vst [vmem:[#allocation2] sm:$0xff] %v218
      %221 = vst [vmem:[#allocation2 + $0x8] sm:$0xff] %v219
      %222 = vrot.lane.b32.xlu0 %v205, 16
      %v223 = vpop.permute.xlu0 %222
      %224 = vrot.lane.b32.xlu0 %v206, 16
      %v225 = vpop.permute.xlu0 %224
      %vm226 = vcmp.lt.s32.totalorder %v212, 16
      %v227 = vsel %vm226, %v223, %v225
      %v228 = vsel %vm226, %v225, %v223
      %s229 = scalar_lea.vmem %s1, 16
      %v230 = vld [vmem:[%s229] sm:$0xff]
      %v231 = vld [vmem:[%s229 + $0x8] sm:$0xff]
      %v232 = vmul.f32 %v228, %v230
      %v233 = vmul.f32 %v227, %v231
      %234 = vst [vmem:[#allocation2 + $0x10] sm:$0xff] %v232
      %235 = vst [vmem:[#allocation2 + $0x18] sm:$0xff] %v233
      %236 = vrot.lane.b32.xlu0 %v205, 15
      %v237 = vpop.permute.xlu0 %236
      %238 = vrot.lane.b32.xlu0 %v206, 15
      %v239 = vpop.permute.xlu0 %238
      %vm240 = vcmp.lt.s32.totalorder %v212, 15
      %v241 = vsel %vm240, %v237, %v239
      %v242 = vsel %vm240, %v239, %v237
      %s243 = scalar_lea.vmem %s1, 32
      %v244 = vld [vmem:[%s243] sm:$0xff]
      %v245 = vld [vmem:[%s243 + $0x8] sm:$0xff]
      %v246 = vmul.f32 %v242, %v244
      %v247 = vmul.f32 %v241, %v245
      %248 = vst [vmem:[#allocation2 + $0x20] sm:$0xff] %v246
      %249 = vst [vmem:[#allocation2 + $0x28] sm:$0xff] %v247
      %250 = vrot.lane.b32.xlu0 %v205, 1
      %v251 = vpop.permute.xlu0 %250
      %252 = vrot.lane.b32.xlu0 %v206, 1
      %v253 = vpop.permute.xlu0 %252
      %vm254 = vcmp.lt.s32.totalorder %v212, 1
      %v255 = vsel %vm254, %v251, %v253
      %v256 = vsel %vm254, %v253, %v251
      %s257 = scalar_lea.vmem %s1, 48
      %v258 = vld [vmem:[%s257] sm:$0xff]
      %v259 = vld [vmem:[%s257 + $0x8] sm:$0xff]
      %v260 = vmul.f32 %v256, %v258
      %v261 = vmul.f32 %v255, %v259
      %262 = vst [vmem:[#allocation2 + $0x30] sm:$0xff] %v260
      %263 = vst [vmem:[#allocation2 + $0x38] sm:$0xff] %v261
      %264 = vst [vmem:[#allocation2 + $0x40] sm:$0xff] %v205
      %265 = vst [vmem:[#allocation2 + $0x48] sm:$0xff] %v206
      %266 = vrot.lane.b32.xlu0 %v205, 127
      %v267 = vpop.permute.xlu0 %266
      %268 = vrot.lane.b32.xlu0 %v206, 127
      %v269 = vpop.permute.xlu0 %268
      %vm270 = vcmp.lt.s32.totalorder %v212, 127
      %v271 = vsel %vm270, %v267, %v269
      %v272 = vsel %vm270, %v269, %v267
      %s273 = scalar_lea.vmem %s1, 80
      %v274 = vld [vmem:[%s273] sm:$0xff]
      %v275 = vld [vmem:[%s273 + $0x8] sm:$0xff]
      %v276 = vmul.f32 %v271, %v274
      %v277 = vmul.f32 %v272, %v275
      %278 = vst [vmem:[#allocation2 + $0x50] sm:$0xff] %v276
      %279 = vst [vmem:[#allocation2 + $0x58] sm:$0xff] %v277
      %280 = vrot.lane.b32.xlu0 %v205, 113
      %v281 = vpop.permute.xlu0 %280
      %282 = vrot.lane.b32.xlu0 %v206, 113
      %v283 = vpop.permute.xlu0 %282
      %vm284 = vcmp.lt.s32.totalorder %v212, 113
      %v285 = vsel %vm284, %v281, %v283
      %v286 = vsel %vm284, %v283, %v281
      %s287 = scalar_lea.vmem %s1, 96
      %v288 = vld [vmem:[%s287] sm:$0xff]
      %v289 = vld [vmem:[%s287 + $0x8] sm:$0xff]
      %v290 = vmul.f32 %v285, %v288
      %v291 = vmul.f32 %v286, %v289
      %292 = vst [vmem:[#allocation2 + $0x60] sm:$0xff] %v290
      %293 = vst [vmem:[#allocation2 + $0x68] sm:$0xff] %v291
      %294 = vrot.lane.b32.xlu0 %v205, 112
      %v295 = vpop.permute.xlu0 %294
      %296 = vrot.lane.b32.xlu0 %v206, 112
      %v297 = vpop.permute.xlu0 %296
      %vm298 = vcmp.lt.s32.totalorder %v212, 112
      %v299 = vsel %vm298, %v295, %v297
      %v300 = vsel %vm298, %v297, %v295
      %s301 = scalar_lea.vmem %s1, 112
      %v302 = vld [vmem:[%s301] sm:$0xff]
      %v303 = vld [vmem:[%s301 + $0x8] sm:$0xff]
      %v304 = vmul.f32 %v299, %v302
      %v305 = vmul.f32 %v300, %v303
      %306 = vst [vmem:[#allocation2 + $0x70] sm:$0xff] %v304
      %307 = vst [vmem:[#allocation2 + $0x78] sm:$0xff] %v305
      %308 = vrot.lane.b32.xlu0 %v205, 111
      %v309 = vpop.permute.xlu0 %308
      %310 = vrot.lane.b32.xlu0 %v206, 111
      %v311 = vpop.permute.xlu0 %310
      %vm312 = vcmp.lt.s32.totalorder %v212, 111
      %v313 = vsel %vm312, %v309, %v311
      %v314 = vsel %vm312, %v311, %v309
      %s315 = scalar_lea.vmem %s1, 128
      %v316 = vld [vmem:[%s315] sm:$0xff]
      %v317 = vld [vmem:[%s315 + $0x8] sm:$0xff]
      %v318 = vmul.f32 %v313, %v316
      %v319 = vmul.f32 %v314, %v317
      %320 = vst [vmem:[#allocation2 + $0x80] sm:$0xff] %v318
      %321 = vst [vmem:[#allocation2 + $0x88] sm:$0xff] %v319
      %v322 = vld [vmem:[%s2] sm:$0xff]
      %v323 = vld [vmem:[#allocation2] sm:$0xff]
      %v324 = vld [vmem:[#allocation2 + $0x8] sm:$0xff]
      %v325 = vld [vmem:[#allocation2 + $0x10] sm:$0xff]
      %v326 = vld [vmem:[#allocation2 + $0x18] sm:$0xff]
      %v327 = vld [vmem:[#allocation2 + $0x20] sm:$0xff]
      %v328 = vld [vmem:[#allocation2 + $0x28] sm:$0xff]
      %v329 = vld [vmem:[#allocation2 + $0x30] sm:$0xff]
      %v330 = vld [vmem:[#allocation2 + $0x38] sm:$0xff]
      %v331 = vld [vmem:[#allocation2 + $0x40] sm:$0xff]
      %v332 = vld [vmem:[#allocation2 + $0x48] sm:$0xff]
      %v333 = vld [vmem:[#allocation2 + $0x50] sm:$0xff]
      %v334 = vld [vmem:[#allocation2 + $0x58] sm:$0xff]
      %v335 = vld [vmem:[#allocation2 + $0x60] sm:$0xff]
      %v336 = vld [vmem:[#allocation2 + $0x68] sm:$0xff]
      %v337 = vld [vmem:[#allocation2 + $0x70] sm:$0xff]
      %v338 = vld [vmem:[#allocation2 + $0x78] sm:$0xff]
      %v339 = vld [vmem:[#allocation2 + $0x80] sm:$0xff]
      %v340 = vld [vmem:[#allocation2 + $0x88] sm:$0xff]
      %v341 = vld [vmem:[#allocation2 + $0x90] sm:$0xff]
      %v342 = vld [vmem:[#allocation2 + $0x98] sm:$0xff]
      %vm343 = vcmask 654336
      %v345 = vsel %vm343, %v322, 0
      %347 = vmatprep.subr.mxu0 %v324
      %348 = vmatpush1.msra.mxu0 %v323
      %349 = vmatprep.subr.mxu0 %v326
      %350 = vmatpush1.msra.mxu0 %v325
      %351 = vmatprep.subr.mxu0 %v328
      %352 = vmatpush1.msra.mxu0 %v327
      %353 = vmatprep.subr.mxu0 %v330
      %354 = vmatpush1.msra.mxu0 %v329
      %355 = vmatprep.subr.mxu0 %v332
      %356 = vmatpush1.msra.mxu0 %v331
      %357 = vmatprep.subr.mxu0 %v334
      %358 = vmatpush1.msra.mxu0 %v333
      %359 = vmatprep.subr.mxu0 %v336
      %360 = vmatpush1.msra.mxu0 %v335
      %361 = vmatprep.subr.mxu0 %v338
      %362 = vmatpush1.msra.mxu0 %v337
      %363 = vmatprep.subr.mxu0 %v340
      %364 = vmatpush1.msra.mxu0 %v339
      %365 = vmatprep.subr.mxu0 %v342
      %366 = vmatpush1.msra.mxu0 %v341
      %367 = vmatprep.subr.mxu0 0.0
      %368 = vmatpush1.msra.mxu0 0.0
      %369 = vmatprep.subr.mxu0 0.0
      %370 = vmatpush1.msra.mxu0 0.0
      %371 = vmatprep.subr.mxu0 0.0
      %372 = vmatpush1.msra.mxu0 0.0
      %373 = vmatprep.subr.mxu0 0.0
      %374 = vmatpush1.msra.mxu0 0.0
      %375 = vmatprep.subr.mxu0 0.0
      %376 = vmatpush1.msra.mxu0 0.0
      %377 = vmatprep.subr.mxu0 0.0
      %378 = vmatpush1.msra.mxu0 0.0
      %379 = vmatprep.subr.mxu0 0.0
      %380 = vmatpush1.msra.mxu0 0.0
      %381 = vmatprep.subr.mxu0 0.0
      %382 = vmatpush1.msra.mxu0 0.0
      %383 = vmatprep.subr.mxu0 0.0
      %384 = vmatpush1.msra.mxu0 0.0
      %385 = vmatprep.subr.mxu0 0.0
      %386 = vmatpush1.msra.mxu0 0.0
      %387 = vmatprep.subr.mxu0 0.0
      %388 = vmatpush1.msra.mxu0 0.0
      %389 = vmatprep.subr.mxu0 0.0
      %390 = vmatpush1.msra.mxu0 0.0
      %391 = vmatprep.subr.mxu0 0.0
      %392 = vmatpush1.msra.mxu0 0.0
      %393 = vmatprep.subr.mxu0 0.0
      %394 = vmatpush1.msra.mxu0 0.0
      %395 = vmatprep.subr.mxu0 0.0
      %396 = vmatpush1.msra.mxu0 0.0
      %397 = vmatprep.subr.mxu0 0.0
      %398 = vmatpush1.msra.mxu0 0.0
      %399 = vmatprep.subr.mxu0 0.0
      %400 = vmatpush1.msra.mxu0 0.0
      %401 = vmatprep.subr.mxu0 0.0
      %402 = vmatpush1.msra.mxu0 0.0
      %403 = vmatprep.subr.mxu0 0.0
      %404 = vmatpush1.msra.mxu0 0.0
      %405 = vmatprep.subr.mxu0 0.0
      %406 = vmatpush1.msra.mxu0 0.0
      %407 = vmatprep.subr.mxu0 0.0
      %408 = vmatpush1.msra.mxu0 0.0
      %409 = vmatprep.subr.mxu0 0.0
      %410 = vmatpush1.msra.mxu0 0.0
      %411 = vmatprep.mubr.f32.mxu0 0.0
      %412 = vmatmul.mubr.f32.gmra.mrb[0].mxu0 %v345
      %v413 = vpop.f32.mrb[0].mxu0
      %v414 = vadd.f32 0.0, %v413
      %v415 = vpop.f32.mrb[0].mxu0
      %v416 = vadd.f32 0.0, %v415
      %417 = vdwg.mxu0
      %v418 = vadd.f32 %v414, %v416
      %419 = vadd.xlane.f32.xlu0 %v418
      %v420 = vpop.xlane.xlu0 %419
      %v421 = vrot.slane %v420, 4
      %v422 = vadd.f32 %v420, %v421
      %v423 = vrot.slane %v422, 2
      %v424 = vadd.f32 %v422, %v423
      %v425 = vrot.slane %v424, 1
      %v426 = vadd.f32 %v424, %v425
      %s427 = vtos %v426
      %v428 = vstv %s427
      %v429 = vmul.f32 %v414, %v414
      %v430 = vmul.f32 %v416, %v416
      %v431 = vadd.f32 %v429, %v430
      %432 = vadd.xlane.f32.xlu0 %v431
      %v433 = vpop.xlane.xlu0 %432
      %v434 = vrot.slane %v433, 4
      %v435 = vadd.f32 %v433, %v434
      %v436 = vrot.slane %v435, 2
      %v437 = vadd.f32 %v435, %v436
      %v438 = vrot.slane %v437, 1
      %v439 = vadd.f32 %v437, %v438
      %s440 = vtos %v439
      %v441 = vstv %s440
      %v442 = vmul.f32 %v428, 0.0009765625
      %v443 = vmul.f32 %v441, 0.0009765625
      %v444 = vmul.f32 %v442, %v442
      %v445 = vsub.f32 %v443, %v444
      %v446 = vsub.f32 %v414, %v442
      %v447 = vsub.f32 %v416, %v442
      %v448 = vadd.f32 %v445, 1e-05
      %v449 = vrsqrt.pop %v448
      %v450 = vmul.f32 %v446, %v449
      %v451 = vmul.f32 %v447, %v449
      %vm452 = vcmp.ge.f32.partialorder %v450, 0.0
      %vm453 = vcmp.ge.f32.partialorder %v451, 0.0
      %v454 = vmul.f32 %v450, 0.2
      %v455 = vmul.f32 %v451, 0.2
      %v456 = vsel %vm452, %v450, %v454
      %v457 = vsel %vm453, %v451, %v455
      %458 = vrot.lane.b32.xlu0 %v456, 17
      %v459 = vpop.permute.xlu0 %458
      %460 = vrot.lane.b32.xlu0 %v457, 17
      %v461 = vpop.permute.xlu0 %460
      %v462 = vsel %vm213, %v459, %v461
      %v463 = vsel %vm213, %v461, %v459
      %v464 = vld [vmem:[%s1] sm:$0xff]
      %v465 = vld [vmem:[%s1 + $0x8] sm:$0xff]
      %v466 = vmul.f32 %v463, %v464
      %v467 = vmul.f32 %v462, %v465
      %468 = vst [vmem:[#allocation2] sm:$0xff] %v466
      %469 = vst [vmem:[#allocation2 + $0x8] sm:$0xff] %v467
      %470 = vrot.lane.b32.xlu0 %v456, 16
      %v471 = vpop.permute.xlu0 %470
      %472 = vrot.lane.b32.xlu0 %v457, 16
      %v473 = vpop.permute.xlu0 %472
      %v474 = vsel %vm226, %v471, %v473
      %v475 = vsel %vm226, %v473, %v471
      %v476 = vld [vmem:[%s229] sm:$0xff]
      %v477 = vld [vmem:[%s229 + $0x8] sm:$0xff]
      %v478 = vmul.f32 %v475, %v476
      %v479 = vmul.f32 %v474, %v477
      %480 = vst [vmem:[#allocation2 + $0x10] sm:$0xff] %v478
      %481 = vst [vmem:[#allocation2 + $0x18] sm:$0xff] %v479
      %482 = vrot.lane.b32.xlu0 %v456, 15
      %v483 = vpop.permute.xlu0 %482
      %484 = vrot.lane.b32.xlu0 %v457, 15
      %v485 = vpop.permute.xlu0 %484
      %v486 = vsel %vm240, %v483, %v485
      %v487 = vsel %vm240, %v485, %v483
      %v488 = vld [vmem:[%s243] sm:$0xff]
      %v489 = vld [vmem:[%s243 + $0x8] sm:$0xff]
      %v490 = vmul.f32 %v487, %v488
      %v491 = vmul.f32 %v486, %v489
      %492 = vst [vmem:[#allocation2 + $0x20] sm:$0xff] %v490
      %493 = vst [vmem:[#allocation2 + $0x28] sm:$0xff] %v491
      %494 = vrot.lane.b32.xlu0 %v456, 1
      %v495 = vpop.permute.xlu0 %494
      %496 = vrot.lane.b32.xlu0 %v457, 1
      %v497 = vpop.permute.xlu0 %496
      %v498 = vsel %vm254, %v495, %v497
      %v499 = vsel %vm254, %v497, %v495
      %v500 = vld [vmem:[%s257] sm:$0xff]
      %v501 = vld [vmem:[%s257 + $0x8] sm:$0xff]
      %v502 = vmul.f32 %v499, %v500
      %v503 = vmul.f32 %v498, %v501
      %504 = vst [vmem:[#allocation2 + $0x30] sm:$0xff] %v502
      %505 = vst [vmem:[#allocation2 + $0x38] sm:$0xff] %v503
      %506 = vst [vmem:[#allocation2 + $0x40] sm:$0xff] %v456
      %507 = vst [vmem:[#allocation2 + $0x48] sm:$0xff] %v457
      %508 = vrot.lane.b32.xlu0 %v456, 127
      %v509 = vpop.permute.xlu0 %508
      %510 = vrot.lane.b32.xlu0 %v457, 127
      %v511 = vpop.permute.xlu0 %510
      %v512 = vsel %vm270, %v509, %v511
      %v513 = vsel %vm270, %v511, %v509
      %v514 = vld [vmem:[%s273] sm:$0xff]
      %v515 = vld [vmem:[%s273 + $0x8] sm:$0xff]
      %v516 = vmul.f32 %v512, %v514
      %v517 = vmul.f32 %v513, %v515
      %518 = vst [vmem:[#allocation2 + $0x50] sm:$0xff] %v516
      %519 = vst [vmem:[#allocation2 + $0x58] sm:$0xff] %v517
      %520 = vrot.lane.b32.xlu0 %v456, 113
      %v521 = vpop.permute.xlu0 %520
      %522 = vrot.lane.b32.xlu0 %v457, 113
      %v523 = vpop.permute.xlu0 %522
      %v524 = vsel %vm284, %v521, %v523
      %v525 = vsel %vm284, %v523, %v521
      %v526 = vld [vmem:[%s287] sm:$0xff]
      %v527 = vld [vmem:[%s287 + $0x8] sm:$0xff]
      %v528 = vmul.f32 %v524, %v526
      %v529 = vmul.f32 %v525, %v527
      %530 = vst [vmem:[#allocation2 + $0x60] sm:$0xff] %v528
      %531 = vst [vmem:[#allocation2 + $0x68] sm:$0xff] %v529
      %532 = vrot.lane.b32.xlu0 %v456, 112
      %v533 = vpop.permute.xlu0 %532
      %534 = vrot.lane.b32.xlu0 %v457, 112
      %v535 = vpop.permute.xlu0 %534
      %v536 = vsel %vm298, %v533, %v535
      %v537 = vsel %vm298, %v535, %v533
      %v538 = vld [vmem:[%s301] sm:$0xff]
      %v539 = vld [vmem:[%s301 + $0x8] sm:$0xff]
      %v540 = vmul.f32 %v536, %v538
      %v541 = vmul.f32 %v537, %v539
      %542 = vst [vmem:[#allocation2 + $0x70] sm:$0xff] %v540
      %543 = vst [vmem:[#allocation2 + $0x78] sm:$0xff] %v541
      %544 = vrot.lane.b32.xlu0 %v456, 111
      %v545 = vpop.permute.xlu0 %544
      %546 = vrot.lane.b32.xlu0 %v457, 111
      %v547 = vpop.permute.xlu0 %546
      %v548 = vsel %vm312, %v545, %v547
      %v549 = vsel %vm312, %v547, %v545
      %v550 = vld [vmem:[%s315] sm:$0xff]
      %v551 = vld [vmem:[%s315 + $0x8] sm:$0xff]
      %v552 = vmul.f32 %v548, %v550
      %v553 = vmul.f32 %v549, %v551
      %554 = vst [vmem:[#allocation2 + $0x80] sm:$0xff] %v552
      %555 = vst [vmem:[#allocation2 + $0x88] sm:$0xff] %v553
      %v556 = vld [vmem:[%s3] sm:$0xff]
      %v557 = vld [vmem:[#allocation2] sm:$0xff]
      %v558 = vld [vmem:[#allocation2 + $0x8] sm:$0xff]
      %v559 = vld [vmem:[#allocation2 + $0x10] sm:$0xff]
      %v560 = vld [vmem:[#allocation2 + $0x18] sm:$0xff]
      %v561 = vld [vmem:[#allocation2 + $0x20] sm:$0xff]
      %v562 = vld [vmem:[#allocation2 + $0x28] sm:$0xff]
      %v563 = vld [vmem:[#allocation2 + $0x30] sm:$0xff]
      %v564 = vld [vmem:[#allocation2 + $0x38] sm:$0xff]
      %v565 = vld [vmem:[#allocation2 + $0x40] sm:$0xff]
      %v566 = vld [vmem:[#allocation2 + $0x48] sm:$0xff]
      %v567 = vld [vmem:[#allocation2 + $0x50] sm:$0xff]
      %v568 = vld [vmem:[#allocation2 + $0x58] sm:$0xff]
      %v569 = vld [vmem:[#allocation2 + $0x60] sm:$0xff]
      %v570 = vld [vmem:[#allocation2 + $0x68] sm:$0xff]
      %v571 = vld [vmem:[#allocation2 + $0x70] sm:$0xff]
      %v572 = vld [vmem:[#allocation2 + $0x78] sm:$0xff]
      %v573 = vld [vmem:[#allocation2 + $0x80] sm:$0xff]
      %v574 = vld [vmem:[#allocation2 + $0x88] sm:$0xff]
      %v575 = vld [vmem:[#allocation2 + $0x90] sm:$0xff]
      %v576 = vld [vmem:[#allocation2 + $0x98] sm:$0xff]
      %v578 = vsel %vm343, %v556, 0
      %580 = vmatprep.subr.mxu0 %v558
      %581 = vmatpush1.msra.mxu0 %v557
      %582 = vmatprep.subr.mxu0 %v560
      %583 = vmatpush1.msra.mxu0 %v559
      %584 = vmatprep.subr.mxu0 %v562
      %585 = vmatpush1.msra.mxu0 %v561
      %586 = vmatprep.subr.mxu0 %v564
      %587 = vmatpush1.msra.mxu0 %v563
      %588 = vmatprep.subr.mxu0 %v566
      %589 = vmatpush1.msra.mxu0 %v565
      %590 = vmatprep.subr.mxu0 %v568
      %591 = vmatpush1.msra.mxu0 %v567
      %592 = vmatprep.subr.mxu0 %v570
      %593 = vmatpush1.msra.mxu0 %v569
      %594 = vmatprep.subr.mxu0 %v572
      %595 = vmatpush1.msra.mxu0 %v571
      %596 = vmatprep.subr.mxu0 %v574
      %597 = vmatpush1.msra.mxu0 %v573
      %598 = vmatprep.subr.mxu0 %v576
      %599 = vmatpush1.msra.mxu0 %v575
      %600 = vmatprep.subr.mxu0 0.0
      %601 = vmatpush1.msra.mxu0 0.0
      %602 = vmatprep.subr.mxu0 0.0
      %603 = vmatpush1.msra.mxu0 0.0
      %604 = vmatprep.subr.mxu0 0.0
      %605 = vmatpush1.msra.mxu0 0.0
      %606 = vmatprep.subr.mxu0 0.0
      %607 = vmatpush1.msra.mxu0 0.0
      %608 = vmatprep.subr.mxu0 0.0
      %609 = vmatpush1.msra.mxu0 0.0
      %610 = vmatprep.subr.mxu0 0.0
      %611 = vmatpush1.msra.mxu0 0.0
      %612 = vmatprep.subr.mxu0 0.0
      %613 = vmatpush1.msra.mxu0 0.0
      %614 = vmatprep.subr.mxu0 0.0
      %615 = vmatpush1.msra.mxu0 0.0
      %616 = vmatprep.subr.mxu0 0.0
      %617 = vmatpush1.msra.mxu0 0.0
      %618 = vmatprep.subr.mxu0 0.0
      %619 = vmatpush1.msra.mxu0 0.0
      %620 = vmatprep.subr.mxu0 0.0
      %621 = vmatpush1.msra.mxu0 0.0
      %622 = vmatprep.subr.mxu0 0.0
      %623 = vmatpush1.msra.mxu0 0.0
      %624 = vmatprep.subr.mxu0 0.0
      %625 = vmatpush1.msra.mxu0 0.0
      %626 = vmatprep.subr.mxu0 0.0
      %627 = vmatpush1.msra.mxu0 0.0
      %628 = vmatprep.subr.mxu0 0.0
      %629 = vmatpush1.msra.mxu0 0.0
      %630 = vmatprep.subr.mxu0 0.0
      %631 = vmatpush1.msra.mxu0 0.0
      %632 = vmatprep.subr.mxu0 0.0
      %633 = vmatpush1.msra.mxu0 0.0
      %634 = vmatprep.subr.mxu0 0.0
      %635 = vmatpush1.msra.mxu0 0.0
      %636 = vmatprep.subr.mxu0 0.0
      %637 = vmatpush1.msra.mxu0 0.0
      %638 = vmatprep.subr.mxu0 0.0
      %639 = vmatpush1.msra.mxu0 0.0
      %640 = vmatprep.subr.mxu0 0.0
      %641 = vmatpush1.msra.mxu0 0.0
      %642 = vmatprep.subr.mxu0 0.0
      %643 = vmatpush1.msra.mxu0 0.0
      %644 = vmatprep.mubr.f32.mxu0 0.0
      %645 = vmatmul.mubr.f32.gmra.mrb[0].mxu0 %v578
      %v646 = vpop.f32.mrb[0].mxu0
      %v647 = vadd.f32 0.0, %v646
      %v648 = vpop.f32.mrb[0].mxu0
      %v649 = vadd.f32 0.0, %v648
      %650 = vdwg.mxu0
      %v651 = vadd.f32 %v647, %v649
      %652 = vadd.xlane.f32.xlu0 %v651
      %v653 = vpop.xlane.xlu0 %652
      %v654 = vrot.slane %v653, 4
      %v655 = vadd.f32 %v653, %v654
      %v656 = vrot.slane %v655, 2
      %v657 = vadd.f32 %v655, %v656
      %v658 = vrot.slane %v657, 1
      %v659 = vadd.f32 %v657, %v658
      %s660 = vtos %v659
      %v661 = vstv %s660
      %v662 = vmul.f32 %v647, %v647
      %v663 = vmul.f32 %v649, %v649
      %v664 = vadd.f32 %v662, %v663
      %665 = vadd.xlane.f32.xlu0 %v664
      %v666 = vpop.xlane.xlu0 %665
      %v667 = vrot.slane %v666, 4
      %v668 = vadd.f32 %v666, %v667
      %v669 = vrot.slane %v668, 2
      %v670 = vadd.f32 %v668, %v669
      %v671 = vrot.slane %v670, 1
      %v672 = vadd.f32 %v670, %v671
      %s673 = vtos %v672
      %v674 = vstv %s673
      %v675 = vmul.f32 %v661, 0.0009765625
      %v676 = vmul.f32 %v674, 0.0009765625
      %v677 = vmul.f32 %v675, %v675
      %v678 = vsub.f32 %v676, %v677
      %v679 = vsub.f32 %v647, %v675
      %v680 = vsub.f32 %v649, %v675
      %v681 = vadd.f32 %v678, 1e-05
      %v682 = vrsqrt.pop %v681
      %v683 = vmul.f32 %v679, %v682
      %v684 = vmul.f32 %v680, %v682
      %v685 = vadd.f32 %v683, %v205
      %v686 = vadd.f32 %v684, %v206
      %vm687 = vcmp.ge.f32.partialorder %v685, 0.0
      %vm688 = vcmp.ge.f32.partialorder %v686, 0.0
      %v689 = vmul.f32 %v685, 0.2
      %v690 = vmul.f32 %v686, 0.2
      %v691 = vsel %vm687, %v685, %v689
      %v692 = vsel %vm688, %v686, %v690
      %693 = vst [vmem:[%s197] sm:$0xff] %v691
      %694 = vst [vmem:[%s197 + $0x8] sm:$0xff] %v692
      %p695 = scmp.lt.s32.totalorder %s15, 1
      %s696 = scalar_select %p695, %s15, 1
      %s697 = smul.addr %s696, 2
      %s698 = smul.addr %s697, 8
      %s699 = scalar_lea.vmem %s4, %s698
      // Predicated region
      $region37: #{fwd.1} parent=35 // pred_check
        %p700 = pneg %p122
      $region38: #{fwd.1} parent=35 // pred_check_branch
        %702 = sbr.rel (%p700) target = $region40
      $region39: #{fwd.1} parent=35 // pred_region
        _
      $region40: #{fwd.1} parent=35 // pred_fallthru
        _
    $region36: #{fwd.1} parent=5 // pred_fallthru
      _
    %p703 = scmp.le.s32.totalorder 2, %s10
    // Predicated region
    $region41: #{fwd.1} parent=5 // pred_check
      %p704 = pneg %p703
    $region42: #{fwd.1} parent=5 // pred_check_branch
      %706 = sbr.rel (%p704) target = $region44
    $region43: #{fwd.1} parent=5 // pred_region
      %s707 = ssub.s32 %s10, 2
      // Predicated region
      $region45: #{fwd.1} parent=43 // pred_check
        %p708 = pneg %p128
      $region46: #{fwd.1} parent=43 // pred_check_branch
        %710 = sbr.rel (%p708) target = $region48
      $region47: #{fwd.1} parent=43 // pred_region
        %p711 = scmp.lt.s32.totalorder %s16, 1
        %s712 = scalar_select %p711, %s16, 1
        %s713 = smul.addr %s712, 2
        %s714 = smul.addr %s713, 8
        %s715 = scalar_lea.vmem %s4, %s714
      $region48: #{fwd.1} parent=43 // pred_fallthru
        _
    $region44: #{fwd.1} parent=5 // pred_fallthru
      _
  $region6: #{fwd.1} parent=0 // loop_footer
    %s14 = sadd.s32 1, %s10
  $region7: #{fwd.1} parent=0 // loop_footer_branch
    %9 = sbr.rel target = $region3
  $region8: #{fwd.1} parent=0 // loop_exit
    _

</llo_original>
